<compile_context>
chip_gen: v7x
topology: tpu7x:2x2x1
jax: 0.10.0
libtpu: 0.0.40
codegen_flags: <defaults>
</compile_context>

<pallas_src>
import functools

import jax
import jax.numpy as jnp
from jax import lax
from jax.experimental import pallas as pl
from jax.experimental.pallas import tpu as pltpu


def _round_up(x, m):
    return ((x + m - 1) // m) * m


def _cdiv(a, b):
    return -(-a // b)


def external_attention_kernel(q_ref, wk_ref, wv_ref, o_ref, acc_ref, rsum_ref,
                              *, s_real, mask_cols):
    # q_ref  : (Bt, N, D)  input dtype (cast to bf16 in-kernel for the MXU)
    # wk_ref : (TS, D) bf16        wv_ref : (D, TS) bf16
    # o_ref  : (Bt, N, D) out dtype
    # acc_ref: (Bt, N, D) f32      rsum_ref: (Bt, N, 1) f32
    s = pl.program_id(1)
    ns = pl.num_programs(1)
    bt, n, d = q_ref.shape
    ts = wk_ref.shape[0]

    @pl.when(s == 0)
    def _():
        acc_ref[...] = jnp.zeros_like(acc_ref)
        rsum_ref[...] = jnp.zeros_like(rsum_ref)

    # logits for this S-tile: contract the LAST dims of both operands (no transpose).
    q2 = q_ref[...].astype(jnp.bfloat16).reshape(bt * n, d)
    logits = lax.dot_general(
        q2, wk_ref[...],
        dimension_numbers=(((1,), (1,)), ((), ())),
        preferred_element_type=jnp.float32,
    ).reshape(bt, n, ts)

    # Column softmax (PyTorch softmax(dim=1), i.e. over the token axis N).
    # Exact reciprocal here; approx is reserved for the final deferred scale.
    m = jnp.max(logits, axis=1, keepdims=True)
    e = jnp.exp(logits - m)
    inv_denom = 1.0 / jnp.sum(e, axis=1, keepdims=True)          # (Bt, 1, TS) f32

    # Zero-padded S columns (zero wk rows -> zero logits) come out of the column softmax
    # as exactly 1/N; kill them by masking the tiny (Bt,1,TS) reciprocal instead of the
    # full (Bt,N,TS) matrix.  (Padded wv columns are zero, so 'out' is unaffected anyway;
    # this only keeps the deferred rowsum exact.)
    if mask_cols:
        col = lax.broadcasted_iota(jnp.int32, (1, 1, ts), 2) + s * ts
        inv_denom = jnp.where(col < s_real, inv_denom, 0.0)

    attn = e * inv_denom                                         # (Bt, N, TS) f32
    rsum_ref[...] += jnp.sum(attn, axis=-1, keepdims=True)

    # Partial output for this S-tile; row (S) normalisation deferred to the last step.
    attn2 = attn.reshape(bt * n, ts).astype(wv_ref.dtype)
    part = lax.dot_general(
        attn2, wv_ref[...],
        dimension_numbers=(((1,), (1,)), ((), ())),
        preferred_element_type=jnp.float32,
    ).reshape(bt, n, d)
    acc_ref[...] += part

    @pl.when(s == ns - 1)
    def _():
        o_ref[...] = (acc_ref[...] *
                      pl.reciprocal(rsum_ref[...], approx=True)).astype(o_ref.dtype)


def _tpu_vmem_and_cores():
    """(per-core VMEM capacity, TensorCores per chip) with safe fallbacks."""
    vmem = 128 << 20
    try:
        vmem = int(pltpu.get_tpu_info().vmem_capacity_bytes)
    except Exception:
        pass
    kind = ""
    try:
        kind = jax.devices()[0].device_kind.lower()
    except Exception:
        pass
    cores = 2 if ("v7" in kind or vmem <= (64 << 20)) else 1
    return vmem, cores


def _step_vmem_bytes(bt, n, d, ts, ns, in_bytes, out_bytes):
    """Conservative per-grid-step VMEM footprint estimate (lane/sublane padded)."""
    npad = _round_up(n, 8)
    dpad = _round_up(d, 128)
    q_blk = 2 * bt * npad * dpad * in_bytes            # double-buffered query block
    o_blk = 2 * bt * npad * dpad * out_bytes           # double-buffered output block
    w_buf = 1 if ns == 1 else 2                        # single-buffered when resident
    w_blk = w_buf * 2 * ts * dpad * 2                  # Wk + Wv tiles, bf16
    acc = bt * npad * dpad * 4 + bt * npad * 128 * 4   # accumulator + rowsum scratch
    tmp = 4 * bt * npad * ts * 4                       # f32 softmax temporaries
    return q_blk + o_blk + w_blk + acc + tmp + (2 << 20)


def _weight_spec(shape, index_map, single_buffer):
    if single_buffer and hasattr(pl, "Buffered"):
        try:
            return pl.BlockSpec(shape, index_map, pipeline_mode=pl.Buffered(1))
        except TypeError:
            pass
    return pl.BlockSpec(shape, index_map)


def external_attention(queries, wk, wv, *, target_rows=512):
    """queries: (B, N, D); wk = mk.weight (S, D); wv = mv.weight (D, S) -> (B, N, D)."""
    B, N, D = queries.shape
    S = wk.shape[0]
    out_dtype = queries.dtype
    in_bytes = queries.dtype.itemsize
    out_bytes = jnp.dtype(out_dtype).itemsize

    # Lane-align only the memory axis S of the (tiny) weights; cast them to bf16 once.
    Sp = _round_up(S, 128)
    wk_b = wk.astype(jnp.bfloat16)
    wv_b = wv.astype(jnp.bfloat16)
    if Sp != S:
        wk_b = jnp.pad(wk_b, ((0, Sp - S), (0, 0)))
        wv_b = jnp.pad(wv_b, ((0, 0), (0, Sp - S)))

    vmem_cap, n_cores = _tpu_vmem_and_cores()
    vmem_budget = int(0.85 * vmem_cap)                 # headroom for Mosaic scratch

    # ---- choose Bt (batches folded into the MXU M dim) and TS (S tile width) ----
    bt = min(B, max(1, _cdiv(target_rows, N)))         # aim for M = Bt*N >= target_rows
    if n_cores > 1:
        nb = _cdiv(B, bt)
        if nb == 1 and B > 1 and _cdiv(B, 2) * N >= 128:
            bt = _cdiv(B, 2)                           # give both TensorCores work
        elif nb > 1 and nb % n_cores != 0:
            nb = _cdiv(nb, n_cores) * n_cores          # balanced 2-TC sharding
            bt = _cdiv(B, nb)

    s_tiles = [t for t in range(Sp, 0, -128) if Sp % t == 0]  # 128-multiples dividing Sp

    def fits(bt_, ts_):
        return _step_vmem_bytes(bt_, N, D, ts_, Sp // ts_,
                                in_bytes, out_bytes) <= vmem_budget

    ts = s_tiles[0]
    for cand in s_tiles:           # shrink the S tile first (streams the weights)
        ts = cand
        if fits(bt, ts):
            break
    while bt > 1 and not fits(bt, ts):   # then shrink the batch tile
        bt = _cdiv(bt, 2)

    nb = _cdiv(B, bt)
    ns = Sp // ts
    Bp = nb * bt

    q = queries
    if Bp != B:                          # cdiv grid: zero-padded tail batch
        q = jnp.pad(q, ((0, Bp - B), (0, 0), (0, 0)))

    kernel = functools.partial(external_attention_kernel,
                               s_real=S, mask_cols=(Sp != S))

    need = _step_vmem_bytes(bt, N, D, ts, ns, in_bytes, out_bytes)
    vmem_limit = int(min(vmem_budget, max(need, 32 << 20)))

    out = pl.pallas_call(
        kernel,
        out_shape=jax.ShapeDtypeStruct((Bp, N, D), out_dtype),
        grid_spec=pltpu.PrefetchScalarGridSpec(
            num_scalar_prefetch=0,
            grid=(nb, ns),
            in_specs=[
                pl.BlockSpec((bt, N, D), lambda b, s: (b, 0, 0)),      # query tile
                _weight_spec((ts, D), lambda b, s: (s, 0), ns == 1),   # Wk S-tile
                _weight_spec((D, ts), lambda b, s: (0, s), ns == 1),   # Wv S-tile
            ],
            out_specs=pl.BlockSpec((bt, N, D), lambda b, s: (b, 0, 0)),
            scratch_shapes=[
                pltpu.VMEM((bt, N, D), jnp.float32),   # output accumulator
                pltpu.VMEM((bt, N, 1), jnp.float32),   # deferred rowsum
            ],
        ),
        compiler_params=pltpu.CompilerParams(
            dimension_semantics=("parallel", "arbitrary"),
            vmem_limit_bytes=vmem_limit,
        ),
    )(q, wk_b, wv_b)

    if Bp != B:
        out = out[:B]
    return out


def reference(queries, wk, wv):
    attn = jnp.einsum("bnd,sd->bns", queries, wk)
    attn = jax.nn.softmax(attn, axis=1)
    attn = attn / jnp.sum(attn, axis=-1, keepdims=True)
    return jnp.einsum("bns,ds->bnd", attn, wv)


if __name__ == "__main__":
    B, N, d_model, S = 2, 8, 32, 64

    key = jax.random.PRNGKey(0)
    kq, kk, kv = jax.random.split(key, 3)

    # Deterministic params mirroring the module: nn.Linear weights ~ N(0, 0.001), no bias.
    wk = 0.001 * jax.random.normal(kk, (S, d_model), dtype=jnp.float32)   # mk.weight
    wv = 0.001 * jax.random.normal(kv, (d_model, S), dtype=jnp.float32)   # mv.weight

    queries = jax.random.normal(kq, (B, N, d_model), dtype=jnp.float32)

    out = jax.block_until_ready(external_attention(queries, wk, wv))
    ref = reference(queries, wk, wv)

    assert out.shape == (B, N, d_model)
    assert out.dtype == queries.dtype
    # bf16 MXU operands + approx reciprocal on the final scale; accumulation/softmax f32.
    assert jnp.allclose(out, ref, atol=1e-4, rtol=2e-2), "mismatch vs pure-JAX reference"

    print("KERNEL_OK")
</pallas_src>

<mosaic_0001>
module attributes {stable_mosaic.version = 11 : i64} {
  func.func @external_attention_kernel(%arg0: i32, %arg1: i32, %arg2: memref<2x8x32xf32, #tpu.memory_space<vmem>>, %arg3: memref<128x32xbf16, #tpu.memory_space<vmem>>, %arg4: memref<32x128xbf16, #tpu.memory_space<vmem>>, %arg5: memref<2x8x32xf32, #tpu.memory_space<vmem>>, %arg6: memref<2x8x32xf32, #tpu.memory_space<vmem>>, %arg7: memref<2x8x1xf32, #tpu.memory_space<vmem>>) attributes {dimension_semantics = [#tpu.dimension_semantics<parallel>, #tpu.dimension_semantics<arbitrary>], iteration_bounds = array<i64: 1, 1>, scalar_prefetch = 0 : i64, scratch_operands = 2 : i64, tpu.core_type = #tpu.core_type<tc>, window_params = [{transform_indices = @transform_0, window_bounds = array<i64: 2, 8, 32>}, {pipeline_mode = #tpu.pipeline_mode<synchronous>, transform_indices = @transform_1, window_bounds = array<i64: 128, 32>}, {pipeline_mode = #tpu.pipeline_mode<synchronous>, transform_indices = @transform_2, window_bounds = array<i64: 32, 128>}, {transform_indices = @transform_3, window_bounds = array<i64: 2, 8, 32>}]} {
    %c0_i32 = arith.constant 0 : i32
    %0 = arith.cmpi eq, %arg1, %c0_i32 : i32
    %1 = arith.extui %0 : i1 to i32
    %c0_i32_0 = arith.constant 0 : i32
    %2 = arith.cmpi ne, %1, %c0_i32_0 : i32
    scf.if %2 {
      %cst_27 = arith.constant 0.000000e+00 : f32
      %46 = vector.broadcast %cst_27 : f32 to vector<2x8x32xf32>
      %c0_28 = arith.constant 0 : index
      %c0_29 = arith.constant 0 : index
      %c0_30 = arith.constant 0 : index
      %47 = vector.load %arg6[%c0_28, %c0_29, %c0_30] : memref<2x8x32xf32, #tpu.memory_space<vmem>>, vector<2x8x32xf32>
      tpu.vector_store %arg6[%c0_28, %c0_29, %c0_30], %46 {strides = array<i32>} : memref<2x8x32xf32, #tpu.memory_space<vmem>>, vector<2x8x32xf32>,
      %cst_31 = arith.constant 0.000000e+00 : f32
      %48 = vector.broadcast %cst_31 : f32 to vector<2x8x1xf32>
      %c0_32 = arith.constant 0 : index
      %c0_33 = arith.constant 0 : index
      %c0_34 = arith.constant 0 : index
      %49 = vector.load %arg7[%c0_32, %c0_33, %c0_34] : memref<2x8x1xf32, #tpu.memory_space<vmem>>, vector<2x8x1xf32>
      tpu.vector_store %arg7[%c0_32, %c0_33, %c0_34], %48 {strides = array<i32>} : memref<2x8x1xf32, #tpu.memory_space<vmem>>, vector<2x8x1xf32>,
    } else {
    }
    %c0 = arith.constant 0 : index
    %c0_1 = arith.constant 0 : index
    %c0_2 = arith.constant 0 : index
    %3 = vector.load %arg2[%c0, %c0_1, %c0_2] : memref<2x8x32xf32, #tpu.memory_space<vmem>>, vector<2x8x32xf32>
    %4 = arith.truncf %3 : vector<2x8x32xf32> to vector<2x8x32xbf16>
    %5 = vector.shape_cast %4 : vector<2x8x32xbf16> to vector<16x32xbf16>
    %c0_3 = arith.constant 0 : index
    %c0_4 = arith.constant 0 : index
    %6 = vector.load %arg3[%c0_3, %c0_4] : memref<128x32xbf16, #tpu.memory_space<vmem>>, vector<128x32xbf16>
    %cst = arith.constant dense<0.000000e+00> : vector<16x128xf32>
    %7 = tpu.matmul %5, %6, %cst {dimension_numbers = #tpu.dot_dimension_numbers<[1], [1], [0], [0], [0, 0, 1, 0], [], []>} : vector<16x32xbf16>, vector<128x32xbf16>, vector<16x128xf32> -> vector<16x128xf32>
    %8 = vector.shape_cast %7 : vector<16x128xf32> to vector<2x8x128xf32>
    %cst_5 = arith.constant dense<0xFF800000> : vector<2x128xf32>
    %9 = vector.multi_reduction <maximumf>, %8, %cst_5 [1] : vector<2x8x128xf32> to vector<2x128xf32>
    %10 = vector.shape_cast %9 : vector<2x128xf32> to vector<2x1x128xf32>
    %11 = vector.broadcast %10 : vector<2x1x128xf32> to vector<2x8x128xf32>
    %12 = arith.subf %8, %11 : vector<2x8x128xf32>
    %13 = math.exp %12 : vector<2x8x128xf32>
    %cst_6 = arith.constant dense<0.000000e+00> : vector<2x128xf32>
    %14 = vector.multi_reduction <add>, %13, %cst_6 [1] : vector<2x8x128xf32> to vector<2x128xf32>
    %15 = vector.shape_cast %14 : vector<2x128xf32> to vector<2x1x128xf32>
    %cst_7 = arith.constant 1.000000e+00 : f32
    %16 = vector.broadcast %cst_7 : f32 to vector<2x1x128xf32>
    %17 = arith.divf %16, %15 : vector<2x1x128xf32>
    %18 = tpu.iota {dimensions = array<i32: 2>} : vector<1x1x128xi32>
    %c128_i32 = arith.constant 128 : i32
    %19 = arith.muli %arg1, %c128_i32 : i32
    %20 = vector.broadcast %19 : i32 to vector<1x1x128xi32>
    %21 = arith.addi %18, %20 : vector<1x1x128xi32>
    %c64_i32 = arith.constant 64 : i32
    %22 = vector.broadcast %c64_i32 : i32 to vector<1x1x128xi32>
    %23 = arith.cmpi slt, %21, %22 : vector<1x1x128xi32>
    %cst_8 = arith.constant 0.000000e+00 : f32
    %24 = vector.shape_cast %23 : vector<1x1x128xi1> to vector<1x1x128xi1>
    %25 = vector.broadcast %24 : vector<1x1x128xi1> to vector<2x1x128xi1>
    %26 = vector.broadcast %cst_8 : f32 to vector<2x1x128xf32>
    %27 = arith.select %25, %17, %26 : vector<2x1x128xi1>, vector<2x1x128xf32>
    %28 = vector.broadcast %27 : vector<2x1x128xf32> to vector<2x8x128xf32>
    %29 = arith.mulf %13, %28 : vector<2x8x128xf32>
    %c0_9 = arith.constant 0 : index
    %c0_10 = arith.constant 0 : index
    %c0_11 = arith.constant 0 : index
    %30 = vector.load %arg7[%c0_9, %c0_10, %c0_11] : memref<2x8x1xf32, #tpu.memory_space<vmem>>, vector<2x8x1xf32>
    %cst_12 = arith.constant dense<0.000000e+00> : vector<2x8xf32>
    %31 = vector.multi_reduction <add>, %29, %cst_12 [2] : vector<2x8x128xf32> to vector<2x8xf32>
    %32 = vector.shape_cast %31 : vector<2x8xf32> to vector<2x8x1xf32>
    %33 = arith.addf %30, %32 : vector<2x8x1xf32>
    %c0_13 = arith.constant 0 : index
    %c0_14 = arith.constant 0 : index
    %c0_15 = arith.constant 0 : index
    %34 = vector.load %arg7[%c0_13, %c0_14, %c0_15] : memref<2x8x1xf32, #tpu.memory_space<vmem>>, vector<2x8x1xf32>
    tpu.vector_store %arg7[%c0_13, %c0_14, %c0_15], %33 {strides = array<i32>} : memref<2x8x1xf32, #tpu.memory_space<vmem>>, vector<2x8x1xf32>,
    %35 = vector.shape_cast %29 : vector<2x8x128xf32> to vector<16x128xf32>
    %36 = arith.truncf %35 : vector<16x128xf32> to vector<16x128xbf16>
    %c0_16 = arith.constant 0 : index
    %c0_17 = arith.constant 0 : index
    %37 = vector.load %arg4[%c0_16, %c0_17] : memref<32x128xbf16, #tpu.memory_space<vmem>>, vector<32x128xbf16>
    %cst_18 = arith.constant dense<0.000000e+00> : vector<16x32xf32>
    %38 = tpu.matmul %36, %37, %cst_18 {dimension_numbers = #tpu.dot_dimension_numbers<[1], [1], [0], [0], [0, 0, 1, 0], [], []>} : vector<16x128xbf16>, vector<32x128xbf16>, vector<16x32xf32> -> vector<16x32xf32>
    %39 = vector.shape_cast %38 : vector<16x32xf32> to vector<2x8x32xf32>
    %c0_19 = arith.constant 0 : index
    %c0_20 = arith.constant 0 : index
    %c0_21 = arith.constant 0 : index
    %40 = vector.load %arg6[%c0_19, %c0_20, %c0_21] : memref<2x8x32xf32, #tpu.memory_space<vmem>>, vector<2x8x32xf32>
    %41 = arith.addf %40, %39 : vector<2x8x32xf32>
    %c0_22 = arith.constant 0 : index
    %c0_23 = arith.constant 0 : index
    %c0_24 = arith.constant 0 : index
    %42 = vector.load %arg6[%c0_22, %c0_23, %c0_24] : memref<2x8x32xf32, #tpu.memory_space<vmem>>, vector<2x8x32xf32>
    tpu.vector_store %arg6[%c0_22, %c0_23, %c0_24], %41 {strides = array<i32>} : memref<2x8x32xf32, #tpu.memory_space<vmem>>, vector<2x8x32xf32>,
    %c0_i32_25 = arith.constant 0 : i32
    %43 = arith.cmpi eq, %arg1, %c0_i32_25 : i32
    %44 = arith.extui %43 : i1 to i32
    %c0_i32_26 = arith.constant 0 : i32
    %45 = arith.cmpi ne, %44, %c0_i32_26 : i32
    scf.if %45 {
      %c0_27 = arith.constant 0 : index
      %c0_28 = arith.constant 0 : index
      %c0_29 = arith.constant 0 : index
      %46 = vector.load %arg6[%c0_27, %c0_28, %c0_29] : memref<2x8x32xf32, #tpu.memory_space<vmem>>, vector<2x8x32xf32>
      %c0_30 = arith.constant 0 : index
      %c0_31 = arith.constant 0 : index
      %c0_32 = arith.constant 0 : index
      %47 = vector.load %arg7[%c0_30, %c0_31, %c0_32] : memref<2x8x1xf32, #tpu.memory_space<vmem>>, vector<2x8x1xf32>
      %48 = tpu.reciprocal %47 {approx = true} : vector<2x8x1xf32> -> vector<2x8x1xf32>
      %49 = vector.broadcast %48 : vector<2x8x1xf32> to vector<2x8x32xf32>
      %50 = arith.mulf %46, %49 : vector<2x8x32xf32>
      %c0_33 = arith.constant 0 : index
      %c0_34 = arith.constant 0 : index
      %c0_35 = arith.constant 0 : index
      %51 = vector.load %arg5[%c0_33, %c0_34, %c0_35] : memref<2x8x32xf32, #tpu.memory_space<vmem>>, vector<2x8x32xf32>
      tpu.vector_store %arg5[%c0_33, %c0_34, %c0_35], %50 {strides = array<i32>} : memref<2x8x32xf32, #tpu.memory_space<vmem>>, vector<2x8x32xf32>,
    } else {
    }
    return
  }
  func.func @transform_0(%arg0: i32, %arg1: i32) -> (i32, i32, i32) {
    %c0_i32 = arith.constant 0 : i32
    %c0_i32_0 = arith.constant 0 : i32
    %c0_i32_1 = arith.constant 0 : i32
    return %arg0, %c0_i32, %c0_i32_0 : i32, i32, i32
  }
  func.func @transform_1(%arg0: i32, %arg1: i32) -> (i32, i32) {
    %c0_i32 = arith.constant 0 : i32
    %c0_i32_0 = arith.constant 0 : i32
    return %arg1, %c0_i32 : i32, i32
  }
  func.func @transform_2(%arg0: i32, %arg1: i32) -> (i32, i32) {
    %c0_i32 = arith.constant 0 : i32
    %c0_i32_0 = arith.constant 0 : i32
    return %c0_i32, %arg1 : i32, i32
  }
  func.func @transform_3(%arg0: i32, %arg1: i32) -> (i32, i32, i32) {
    %c0_i32 = arith.constant 0 : i32
    %c0_i32_0 = arith.constant 0 : i32
    %c0_i32_1 = arith.constant 0 : i32
    return %arg0, %c0_i32, %c0_i32_0 : i32, i32, i32
  }
}

</mosaic_0001>

<llo_original>
// kernel: tpu_custom_call.1
$region0: #{tpu_custom_call.1}
  #allocation0 [shape = 'u32[]', space=smem, size = 0x4, offset = 0x4, fixed_abs, tag = 'smem constant byte address 0x4 - core index']
  #allocation1 [shape = 'u32[144,128]{1,0:T(1,128)}', space=vmem, size = 0x12000, scoped, tag = 'internal scratch']
  #allocation2 [shape = 'f32[2,8,32]{2,1,0:T(8,128)}', space=vmem, size = 0x2000, scoped, tag = 'scratch operand']
  #allocation3 [shape = 'f32[2,8,1]{2,1,0:T(8,128)}', space=vmem, size = 0x2000, scoped, tag = 'scratch operand']
  %s0 = inlined_call_operand.vmem [shape: f32[2,8,32], index: 0, kind: input, shape index: {}]
  %s1 = inlined_call_operand.vmem [shape: bf16[128,32], index: 1, kind: input, shape index: {}]
  %s2 = inlined_call_operand.vmem [shape: bf16[32,128], index: 2, kind: input, shape index: {}]
  %s3 = inlined_call_operand.hbm [shape: f32[2,8,32], index: 3, kind: output, shape index: {}]
  %s4 = sld [smem:[#allocation0]]
  $region30: #{tpu_custom_call.1} parent=0
    _
  %s6 = ssub.s32 1, %s4
  %s7 = scalar_select 0, %s6, %s4
  $region1: #{tpu_custom_call.1} parent=0
    #allocation4 [shape = 'u8[8192]{0}', space=vmem, size = 0x2000, scoped, tag = 'output window, operand 0, single buffered']
    #allocation5 [shape = 's32[1]{0}', space=sflag, size = 0x4, scoped, tag = 'scoped memory for tpu_custom_call.1']
    %8 = vsyncpa [#allocation5], 0
    // Predicated region
    $region2: #{tpu_custom_call.1} parent=1 // pred_check
      _
    $region3: #{tpu_custom_call.1} parent=1 // pred_check_branch
      %10 = sbr.rel (0) target = $region5
    $region4: #{tpu_custom_call.1} parent=1 // pred_region
      _
    $region5: #{tpu_custom_call.1} parent=1 // pred_fallthru
      _
    // Predicated region
    $region6: #{tpu_custom_call.1} parent=1 // pred_check
      _
    $region7: #{tpu_custom_call.1} parent=1 // pred_check_branch
      %12 = sbr.rel (0) target = $region9
    $region8: #{tpu_custom_call.1} parent=1 // pred_region
      _
    $region9: #{tpu_custom_call.1} parent=1 // pred_fallthru
      _
    // Predicated region
    $region10: #{tpu_custom_call.1} parent=1 // pred_check
      _
    $region11: #{tpu_custom_call.1} parent=1 // pred_check_branch
      %14 = sbr.rel (0) target = $region13
    $region12: #{tpu_custom_call.1} parent=1 // pred_region
      _
    $region13: #{tpu_custom_call.1} parent=1 // pred_fallthru
      _
    %p16 = scmp.eq.s32.totalorder 0, 0
    // Predicated region
    $region14: #{tpu_custom_call.1} parent=1 // pred_check
      %p17 = pneg %p16
    $region15: #{tpu_custom_call.1} parent=1 // pred_check_branch
      %19 = sbr.rel (%p17) target = $region17
    $region16: #{tpu_custom_call.1} parent=1 // pred_region
      %vm20 = vcmask 261120
      %21 = vst.msk [vmem:[#allocation2] sm:$0xff] %vm20, 0.0
      %22 = vst.msk [vmem:[#allocation2 + $0x8] sm:$0xff] %vm20, 0.0
      %vm23 = vcmask 7168
      %24 = vst.msk [vmem:[#allocation3] sm:$0xff] %vm23, 0.0
      %25 = vst.msk [vmem:[#allocation3 + $0x8] sm:$0xff] %vm23, 0.0
    $region17: #{tpu_custom_call.1} parent=1 // pred_fallthru
      _
    %v26 = vld [vmem:[%s0] sm:$0xff]
    %v27 = vld [vmem:[%s0 + $0x8] sm:$0xff]
    %v28 = vpack.c.bf16 %v26, %v26
    %v29 = vpack.c.bf16 %v27, %v27
    %v30 = vld [vmem:[%s1] sm:$0xf]
    %v31 = vld [vmem:[%s1 + $0x4] sm:$0xf]
    %v32 = vld [vmem:[%s1 + $0x8] sm:$0xf]
    %v33 = vld [vmem:[%s1 + $0xc] sm:$0xf]
    %v34 = vld [vmem:[%s1 + $0x10] sm:$0xf]
    %v35 = vld [vmem:[%s1 + $0x14] sm:$0xf]
    %v36 = vld [vmem:[%s1 + $0x18] sm:$0xf]
    %v37 = vld [vmem:[%s1 + $0x1c] sm:$0xf]
    %v38 = vld [vmem:[%s1 + $0x20] sm:$0xf]
    %v39 = vld [vmem:[%s1 + $0x24] sm:$0xf]
    %v40 = vld [vmem:[%s1 + $0x28] sm:$0xf]
    %v41 = vld [vmem:[%s1 + $0x2c] sm:$0xf]
    %v42 = vld [vmem:[%s1 + $0x30] sm:$0xf]
    %v43 = vld [vmem:[%s1 + $0x34] sm:$0xf]
    %v44 = vld [vmem:[%s1 + $0x38] sm:$0xf]
    %v45 = vld [vmem:[%s1 + $0x3c] sm:$0xf]
    %v48 = vunpack.c.l.b16 %v28
    %v49 = vunpack.c.l.b16 %v29
    %v50 = vpack.c.b16 %v49, %v48
    %v67 = vunpack.c.l.b16 %v30
    %v68 = vunpack.c.l.b16 %v31
    %v69 = vunpack.c.l.b16 %v32
    %v70 = vunpack.c.l.b16 %v33
    %v71 = vunpack.c.l.b16 %v34
    %v72 = vunpack.c.l.b16 %v35
    %v73 = vunpack.c.l.b16 %v36
    %v74 = vunpack.c.l.b16 %v37
    %v75 = vunpack.c.l.b16 %v38
    %v76 = vunpack.c.l.b16 %v39
    %v77 = vunpack.c.l.b16 %v40
    %v78 = vunpack.c.l.b16 %v41
    %v79 = vunpack.c.l.b16 %v42
    %v80 = vunpack.c.l.b16 %v43
    %v81 = vunpack.c.l.b16 %v44
    %v82 = vunpack.c.l.b16 %v45
    %v83 = vpack.c.b16 %v68, %v67
    %v84 = vpack.c.b16 %v70, %v69
    %v85 = vpack.c.b16 %v72, %v71
    %v86 = vpack.c.b16 %v74, %v73
    %v87 = vpack.c.b16 %v76, %v75
    %v88 = vpack.c.b16 %v78, %v77
    %v89 = vpack.c.b16 %v80, %v79
    %v90 = vpack.c.b16 %v82, %v81
    %vm91 = vcmask 261120
    %v93 = vsel %vm91, %v50, 0
    %v96 = vsel %vm91, %v83, 0
    %v99 = vsel %vm91, %v84, 0
    %v102 = vsel %vm91, %v85, 0
    %v105 = vsel %vm91, %v86, 0
    %v108 = vsel %vm91, %v87, 0
    %v111 = vsel %vm91, %v88, 0
    %v114 = vsel %vm91, %v89, 0
    %v117 = vsel %vm91, %v90, 0
    %119 = vmatprep.subr.bf16.mxu0 0
    %120 = vmatpush1.bf16.xpose.msra.mxu0 %v96
    %121 = vmatprep.subr.bf16.mxu0 0
    %122 = vmatpush1.bf16.xpose.msra.mxu0 %v99
    %123 = vmatprep.subr.bf16.mxu0 0
    %124 = vmatpush1.bf16.xpose.msra.mxu0 %v102
    %125 = vmatprep.subr.bf16.mxu0 0
    %126 = vmatpush1.bf16.xpose.msra.mxu0 %v105
    %127 = vmatprep.subr.bf16.mxu0 0
    %128 = vmatpush1.bf16.xpose.msra.mxu0 %v108
    %129 = vmatprep.subr.bf16.mxu0 0
    %130 = vmatpush1.bf16.xpose.msra.mxu0 %v111
    %131 = vmatprep.subr.bf16.mxu0 0
    %132 = vmatpush1.bf16.xpose.msra.mxu0 %v114
    %133 = vmatprep.subr.bf16.mxu0 0
    %134 = vmatpush1.bf16.xpose.msra.mxu0 %v117
    %135 = vmatprep.subr.bf16.mxu0 0
    %136 = vmatpush1.bf16.xpose.msra.mxu0 0
    %137 = vmatprep.subr.bf16.mxu0 0
    %138 = vmatpush1.bf16.xpose.msra.mxu0 0
    %139 = vmatprep.subr.bf16.mxu0 0
    %140 = vmatpush1.bf16.xpose.msra.mxu0 0
    %141 = vmatprep.subr.bf16.mxu0 0
    %142 = vmatpush1.bf16.xpose.msra.mxu0 0
    %143 = vmatprep.subr.bf16.mxu0 0
    %144 = vmatpush1.bf16.xpose.msra.mxu0 0
    %145 = vmatprep.subr.bf16.mxu0 0
    %146 = vmatpush1.bf16.xpose.msra.mxu0 0
    %147 = vmatprep.subr.bf16.mxu0 0
    %148 = vmatpush1.bf16.xpose.msra.mxu0 0
    %149 = vmatprep.subr.bf16.mxu0 0
    %150 = vmatpush1.bf16.xpose.msra.mxu0 0
    %151 = vmatprep.mubr.bf16.mxu0 0
    %152 = vmatmul.mubr.bf16.gmra.mrb[0].mxu0 %v93
    %v153 = vpop.f32.mrb[0].mxu0
    %v154 = vadd.f32 0.0, %v153
    %v155 = vpop.f32.mrb[0].mxu0
    %v156 = vpop.f32.mrb[0].mxu0
    %v157 = vadd.f32 0.0, %v156
    %v158 = vpop.f32.mrb[0].mxu0
    %159 = vdwg.mxu0
    %v160 = vrot.slane %v154, 4
    %v161 = vmax.f32 %v154, %v160
    %v162 = vrot.slane %v161, 2
    %v163 = vmax.f32 %v161, %v162
    %v164 = vrot.slane %v163, 1
    %v165 = vmax.f32 %v163, %v164
    %v166 = vrot.slane %v157, 4
    %v167 = vmax.f32 %v157, %v166
    %v168 = vrot.slane %v167, 2
    %v169 = vmax.f32 %v167, %v168
    %v170 = vrot.slane %v169, 1
    %v171 = vmax.f32 %v169, %v170
    %v172 = vsub.f32 %v154, %v165
    %v173 = vsub.f32 %v157, %v171
    %v174 = vmul.f32 %v172, 1.442695
    %v175 = vpow.pop %v174
    %v176 = vmul.f32 %v173, 1.442695
    %v177 = vpow.pop %v176
    %v178 = vrot.slane %v175, 4
    %v179 = vadd.f32 %v175, %v178
    %v180 = vrot.slane %v179, 2
    %v181 = vadd.f32 %v179, %v180
    %v182 = vrot.slane %v181, 1
    %v183 = vadd.f32 %v181, %v182
    %v184 = vrot.slane %v177, 4
    %v185 = vadd.f32 %v177, %v184
    %v186 = vrot.slane %v185, 2
    %v187 = vadd.f32 %v185, %v186
    %v188 = vrot.slane %v187, 1
    %v189 = vadd.f32 %v187, %v188
    %v190 = vrcp.pop %v183
    %v191 = vmul.f32 1.0, %v190
    %v192 = vrcp.pop %v189
    %v193 = vmul.f32 1.0, %v192
    %v194 = vlaneseq
    %v195 = vand.u32 %v194, 127
    %s196 = smul.u32 0, 128
    %v197 = vstv %s196
    %v198 = vadd.s32 %v195, %v197
    %vm199 = vcmp.lt.s32.totalorder %v198, 64
    %v200 = vsel %vm199, 1, 0
    %vm201 = vcmp.eq.s32.totalorder %v200, 1
    %v202 = vsel %vm201, %v191, 0.0
    %v203 = vsel %vm201, %v193, 0.0
    %v204 = vmul.f32 %v175, %v202
    %v205 = vmul.f32 %v177, %v203
    %v206 = vld [vmem:[#allocation3] sm:$0xff]
    %v207 = vld [vmem:[#allocation3 + $0x8] sm:$0xff]
    %208 = vadd.xlane.f32.xlu0 %v204
    %v209 = vpop.xlane.xlu0 %208
    %210 = vadd.xlane.f32.xlu0 %v205
    %v211 = vpop.xlane.xlu0 %210
    %v212 = vadd.f32 %v206, %v209
    %v213 = vadd.f32 %v207, %v211
    %vm214 = vcmask 7168
    %215 = vst.msk [vmem:[#allocation3] sm:$0xff] %vm214, %v212
    %216 = vst.msk [vmem:[#allocation3 + $0x8] sm:$0xff] %vm214, %v213
    %v217 = vpack.c.bf16 %v205, %v204
    %v218 = vld [vmem:[%s2] sm:$0xf]
    %v219 = vld [vmem:[%s2 + $0x4] sm:$0xf]
    %v220 = vld [vmem:[%s2 + $0x8] sm:$0xf]
    %v221 = vld [vmem:[%s2 + $0xc] sm:$0xf]
    %v226 = vunpack.c.l.b16 %v218
    %v227 = vunpack.c.l.b16 %v219
    %v228 = vunpack.c.l.b16 %v220
    %v229 = vunpack.c.l.b16 %v221
    %v230 = vpack.c.b16 %v227, %v226
    %v231 = vpack.c.b16 %v229, %v228
    %234 = vmatprep.subr.bf16.mxu0 0
    %235 = vmatpush1.bf16.xpose.msra.mxu0 %v230
    %236 = vmatprep.subr.bf16.mxu0 0
    %237 = vmatpush1.bf16.xpose.msra.mxu0 %v231
    %238 = vmatprep.subr.bf16.mxu0 0
    %239 = vmatpush1.bf16.xpose.msra.mxu0 0
    %240 = vmatprep.subr.bf16.mxu0 0
    %241 = vmatpush1.bf16.xpose.msra.mxu0 0
    %242 = vmatprep.subr.bf16.mxu0 0
    %243 = vmatpush1.bf16.xpose.msra.mxu0 0
    %244 = vmatprep.subr.bf16.mxu0 0
    %245 = vmatpush1.bf16.xpose.msra.mxu0 0
    %246 = vmatprep.subr.bf16.mxu0 0
    %247 = vmatpush1.bf16.xpose.msra.mxu0 0
    %248 = vmatprep.subr.bf16.mxu0 0
    %249 = vmatpush1.bf16.xpose.msra.mxu0 0
    %250 = vmatprep.subr.bf16.mxu0 0
    %251 = vmatpush1.bf16.xpose.msra.mxu0 0
    %252 = vmatprep.subr.bf16.mxu0 0
    %253 = vmatpush1.bf16.xpose.msra.mxu0 0
    %254 = vmatprep.subr.bf16.mxu0 0
    %255 = vmatpush1.bf16.xpose.msra.mxu0 0
    %256 = vmatprep.subr.bf16.mxu0 0
    %257 = vmatpush1.bf16.xpose.msra.mxu0 0
    %258 = vmatprep.subr.bf16.mxu0 0
    %259 = vmatpush1.bf16.xpose.msra.mxu0 0
    %260 = vmatprep.subr.bf16.mxu0 0
    %261 = vmatpush1.bf16.xpose.msra.mxu0 0
    %262 = vmatprep.subr.bf16.mxu0 0
    %263 = vmatpush1.bf16.xpose.msra.mxu0 0
    %264 = vmatprep.subr.bf16.mxu0 0
    %265 = vmatpush1.bf16.xpose.msra.mxu0 0
    %266 = vmatprep.mubr.bf16.mxu0 0
    %267 = vmatmul.mubr.bf16.gmra.mrb[0].mxu0 %v217
    %v268 = vpop.f32.mrb[0].mxu0
    %v269 = vadd.f32 0.0, %v268
    %v270 = vpop.f32.mrb[0].mxu0
    %v271 = vpop.f32.mrb[0].mxu0
    %v272 = vadd.f32 0.0, %v271
    %v273 = vpop.f32.mrb[0].mxu0
    %274 = vdwg.mxu0
    %v275 = vld [vmem:[#allocation2] sm:$0xff]
    %v276 = vld [vmem:[#allocation2 + $0x8] sm:$0xff]
    %v277 = vadd.f32 %v275, %v269
    %v278 = vadd.f32 %v276, %v272
    %279 = vst.msk [vmem:[#allocation2] sm:$0xff] %vm91, %v277
    %280 = vst.msk [vmem:[#allocation2 + $0x8] sm:$0xff] %vm91, %v278
    // Predicated region
    $region18: #{tpu_custom_call.1} parent=1 // pred_check
      %p281 = pneg %p16
    $region19: #{tpu_custom_call.1} parent=1 // pred_check_branch
      %283 = sbr.rel (%p281) target = $region21
    $region20: #{tpu_custom_call.1} parent=1 // pred_region
      %v284 = vld [vmem:[#allocation2] sm:$0xff]
      %v285 = vld [vmem:[#allocation2 + $0x8] sm:$0xff]
      %v286 = vld [vmem:[#allocation3] sm:$0xff]
      %v287 = vld [vmem:[#allocation3 + $0x8] sm:$0xff]
      %v288 = vrcp.pop %v286
      %v289 = vrcp.pop %v287
      %291 = vset.pattern.permute.xlu0 0
      %292 = vperm.xlu0 %291, %v288
      %v293 = vpop.permute.xlu0 %292
      %296 = vset.pattern.permute.xlu0 0
      %297 = vperm.xlu0 %296, %v289
      %v298 = vpop.permute.xlu0 %297
      %v300 = vmul.f32 %v284, %v293
      %v301 = vmul.f32 %v285, %v298
      %302 = vst.msk [vmem:[#allocation4] sm:$0xff] %vm91, %v300
      %303 = vst.msk [vmem:[#allocation4 + $0x8] sm:$0xff] %vm91, %v301
    $region21: #{tpu_custom_call.1} parent=1 // pred_fallthru
      _
    // Predicated region
    $region22: #{tpu_custom_call.1} parent=1 // pred_check
      _
    $region23: #{tpu_custom_call.1} parent=1 // pred_check_branch
      %305 = sbr.rel (0) target = $region25
    $region24: #{tpu_custom_call.1} parent=1 // pred_region
      %s307 = ssub.s32 256, 256
      %308 = vsyncadd [#allocation5], %s307
      %s309 = sshll.u32 [#allocation4], 4
      %s310 = int_to_ptr.vmem [resolvable:$true] %s309
      %315 = dma.vmem_to_hbm [thread:$0]  %s310, 256, %s3, [#allocation5], 128, 128, 8
    $region25: #{tpu_custom_call.1} parent=1 // pred_fallthru
      _
    // Predicated region
    $region26: #{tpu_custom_call.1} parent=1 // pred_check
      _
    $region27: #{tpu_custom_call.1} parent=1 // pred_check_branch
      %317 = sbr.rel (0) target = $region29
    $region28: #{tpu_custom_call.1} parent=1 // pred_region
      %318 = dma.done [#allocation5], 256
    $region29: #{tpu_custom_call.1} parent=1 // pred_fallthru
      _
    %319 = vsyncpa [#allocation5], 1

</llo_original>
